<compile_context>
chip_gen: v5e
topology: v5e:2x2
jax: 0.10.0
libtpu: 0.0.40
codegen_flags: <defaults>
</compile_context>

<pallas_src>
import functools

import jax
import jax.numpy as jnp
from jax.experimental import pallas as pl
from jax.experimental.pallas import tpu as pltpu

LANE = 128
VMEM_LIMIT = 32 * 1024 * 1024  # explicit scoped-VMEM budget, safe on v5e/v6e/v7x


def _round_up(v, m):
    return (v + m - 1) // m * m


def _pad_to(x, rows, cols, value=0.0):
    r, c = x.shape
    return jnp.pad(x, ((0, rows - r), (0, cols - c)), constant_values=value)


def _pick_tile(dim, cap):
    """Largest power-of-two tile <= cap (and >= 128) that divides dim."""
    t = cap
    while t > LANE and dim % t:
        t //= 2
    return t


# ----------------------------------------------------------------------------
# Row-tiled matmul with resident RHS:  O = X @ W     (no bias, no k reduction)
# Used for the small feature transform X @ W1.
# ----------------------------------------------------------------------------
def _rowtile_matmul_kernel(x_ref, w_ref, o_ref):
    o_ref[...] = jnp.dot(x_ref[...], w_ref[...],
                         preferred_element_type=jnp.float32).astype(o_ref.dtype)


def rowtile_matmul(x, w, *, tm, out_dtype=jnp.float32):
    m, k = x.shape
    _, n = w.shape
    assert m % tm == 0
    return pl.pallas_call(
        _rowtile_matmul_kernel,
        out_shape=jax.ShapeDtypeStruct((m, n), out_dtype),
        grid_spec=pltpu.PrefetchScalarGridSpec(
            num_scalar_prefetch=0,
            grid=(m // tm,),
            in_specs=[
                pl.BlockSpec((tm, k), lambda i: (i, 0)),
                pl.BlockSpec((k, n), lambda i: (0, 0)),      # resident W
            ],
            out_specs=pl.BlockSpec((tm, n), lambda i: (i, 0)),
        ),
        compiler_params=pltpu.CompilerParams(
            dimension_semantics=("parallel",),
            vmem_limit_bytes=VMEM_LIMIT),
    )(x, w)


# ----------------------------------------------------------------------------
# Aggregation matmul #1 with fused BN partial statistics:
#   H1 = A_hat @ B + bias
#   psum[i], psq[i] = per-row-tile masked column sum / sum-of-squares of H1
# A is tiled (tm, tk) bf16; B (K x C) is VMEM-resident (constant index map) and
# sliced per k-step with pl.ds.  fp32 accumulation in VMEM scratch.
# ----------------------------------------------------------------------------
def _agg_stats_kernel(a_ref, b_ref, bias_ref, h_ref, psum_ref, psq_ref,
                      acc_ref, *, tm, tk, n_real):
    i = pl.program_id(0)
    k = pl.program_id(1)

    @pl.when(k == 0)
    def _():
        acc_ref[...] = jnp.zeros_like(acc_ref)

    k0 = pl.multiple_of(k * tk, tk)
    acc_ref[...] += jnp.dot(a_ref[...], b_ref[pl.ds(k0, tk), :],
                            preferred_element_type=jnp.float32)

    @pl.when(k == pl.num_programs(1) - 1)
    def _():
        hblk = acc_ref[...] + bias_ref[...]
        h_ref[...] = hblk
        # Masked per-tile partial BN stats (padded rows never pollute batch stats).
        row = i * tm + jax.lax.broadcasted_iota(jnp.int32, hblk.shape, 0)
        hm = jnp.where(row < n_real, hblk, 0.0)
        psum_ref[...] = jnp.sum(hm, axis=0, keepdims=True)
        psq_ref[...] = jnp.sum(hm * hm, axis=0, keepdims=True)


def agg_matmul_stats(a, b, bias, *, n_real, tm, tk):
    m, kdim = a.shape
    _, c = b.shape
    assert m % tm == 0 and kdim % tk == 0
    n_tiles = m // tm
    return pl.pallas_call(
        functools.partial(_agg_stats_kernel, tm=tm, tk=tk, n_real=n_real),
        out_shape=(jax.ShapeDtypeStruct((m, c), jnp.float32),
                   jax.ShapeDtypeStruct((n_tiles, c), jnp.float32),
                   jax.ShapeDtypeStruct((n_tiles, c), jnp.float32)),
        grid_spec=pltpu.PrefetchScalarGridSpec(
            num_scalar_prefetch=0,
            grid=(n_tiles, kdim // tk),
            in_specs=[
                pl.BlockSpec((tm, tk), lambda i, k: (i, k)),
                pl.BlockSpec((kdim, c), lambda i, k: (0, 0)),   # resident B
                pl.BlockSpec((1, c), lambda i, k: (0, 0)),
            ],
            out_specs=(pl.BlockSpec((tm, c), lambda i, k: (i, 0)),
                       pl.BlockSpec((1, c), lambda i, k: (i, 0)),
                       pl.BlockSpec((1, c), lambda i, k: (i, 0))),
            scratch_shapes=[pltpu.VMEM((tm, c), jnp.float32)],
        ),
        compiler_params=pltpu.CompilerParams(
            dimension_semantics=("parallel", "arbitrary"),
            vmem_limit_bytes=VMEM_LIMIT),
    )(a, b, bias)


# ----------------------------------------------------------------------------
# Aggregation matmul #2 (no stats):  OUT = A_hat @ B + bias
# ----------------------------------------------------------------------------
def _agg_kernel(a_ref, b_ref, bias_ref, o_ref, acc_ref, *, tk):
    k = pl.program_id(1)

    @pl.when(k == 0)
    def _():
        acc_ref[...] = jnp.zeros_like(acc_ref)

    k0 = pl.multiple_of(k * tk, tk)
    acc_ref[...] += jnp.dot(a_ref[...], b_ref[pl.ds(k0, tk), :],
                            preferred_element_type=jnp.float32)

    @pl.when(k == pl.num_programs(1) - 1)
    def _():
        o_ref[...] = (acc_ref[...] + bias_ref[...]).astype(o_ref.dtype)


def agg_matmul(a, b, bias, *, tm, tk):
    m, kdim = a.shape
    _, c = b.shape
    assert m % tm == 0 and kdim % tk == 0
    return pl.pallas_call(
        functools.partial(_agg_kernel, tk=tk),
        out_shape=jax.ShapeDtypeStruct((m, c), jnp.float32),
        grid_spec=pltpu.PrefetchScalarGridSpec(
            num_scalar_prefetch=0,
            grid=(m // tm, kdim // tk),
            in_specs=[
                pl.BlockSpec((tm, tk), lambda i, k: (i, k)),
                pl.BlockSpec((kdim, c), lambda i, k: (0, 0)),   # resident B
                pl.BlockSpec((1, c), lambda i, k: (0, 0)),
            ],
            out_specs=pl.BlockSpec((tm, c), lambda i, k: (i, 0)),
            scratch_shapes=[pltpu.VMEM((tm, c), jnp.float32)],
        ),
        compiler_params=pltpu.CompilerParams(
            dimension_semantics=("parallel", "arbitrary"),
            vmem_limit_bytes=VMEM_LIMIT),
    )(a, b, bias)


# ----------------------------------------------------------------------------
# Tiny kernel: reduce per-tile BN partials and compute scale/shift ONCE.
# scale = gamma / sqrt(var + eps);  shift = beta - mean * scale
# NOTE: one-pass variance (E[x^2] - mean^2); fine at these scales.
# ----------------------------------------------------------------------------
def _bn_scale_shift_kernel(psum_ref, psq_ref, g_ref, be_ref,
                           scale_ref, shift_ref, *, n_real):
    inv_n = 1.0 / float(n_real)
    s = jnp.sum(psum_ref[...], axis=0, keepdims=True)
    sq = jnp.sum(psq_ref[...], axis=0, keepdims=True)
    mean = s * inv_n
    var = sq * inv_n - mean * mean
    scale = g_ref[...] * jax.lax.rsqrt(var + 1e-5)
    scale_ref[...] = scale
    shift_ref[...] = be_ref[...] - mean * scale


def bn_scale_shift(psum, psq, gamma, beta, *, n_real):
    t, c = psum.shape
    return pl.pallas_call(
        functools.partial(_bn_scale_shift_kernel, n_real=n_real),
        out_shape=(jax.ShapeDtypeStruct((1, c), jnp.float32),
                   jax.ShapeDtypeStruct((1, c), jnp.float32)),
        grid_spec=pltpu.PrefetchScalarGridSpec(
            num_scalar_prefetch=0,
            grid=(1,),
            in_specs=[pl.BlockSpec((t, c), lambda i: (0, 0)),
                      pl.BlockSpec((t, c), lambda i: (0, 0)),
                      pl.BlockSpec((1, c), lambda i: (0, 0)),
                      pl.BlockSpec((1, c), lambda i: (0, 0))],
            out_specs=(pl.BlockSpec((1, c), lambda i: (0, 0)),
                       pl.BlockSpec((1, c), lambda i: (0, 0))),
        ),
        compiler_params=pltpu.CompilerParams(
            dimension_semantics=("arbitrary",),
            vmem_limit_bytes=VMEM_LIMIT),
    )(psum, psq, gamma, beta)


# ----------------------------------------------------------------------------
# Fused BatchNorm (precomputed scale/shift) + ReLU + (H @ W2), row-tiled,
# W2 / scale / shift resident.
# ----------------------------------------------------------------------------
def _bn_relu_w2_kernel(h_ref, sc_ref, sh_ref, w_ref, o_ref):
    hr = jnp.maximum(h_ref[...] * sc_ref[...] + sh_ref[...], 0.0)
    o_ref[...] = jnp.dot(hr, w_ref[...],
                         preferred_element_type=jnp.float32).astype(o_ref.dtype)


def bn_relu_matmul(h, scale, shift, w, *, tm, out_dtype=jnp.float32):
    m, c = h.shape
    _, n = w.shape
    assert m % tm == 0
    return pl.pallas_call(
        _bn_relu_w2_kernel,
        out_shape=jax.ShapeDtypeStruct((m, n), out_dtype),
        grid_spec=pltpu.PrefetchScalarGridSpec(
            num_scalar_prefetch=0,
            grid=(m // tm,),
            in_specs=[
                pl.BlockSpec((tm, c), lambda i: (i, 0)),
                pl.BlockSpec((1, c), lambda i: (0, 0)),
                pl.BlockSpec((1, c), lambda i: (0, 0)),
                pl.BlockSpec((c, n), lambda i: (0, 0)),        # resident W2
            ],
            out_specs=pl.BlockSpec((tm, n), lambda i: (i, 0)),
        ),
        compiler_params=pltpu.CompilerParams(
            dimension_semantics=("parallel",),
            vmem_limit_bytes=VMEM_LIMIT),
    )(h, scale, shift, w)


# ----------------------------------------------------------------------------
# Full forward pass
# ----------------------------------------------------------------------------
def gcn_forward(a_hat, x, w1, b1, gamma, beta, w2, b2):
    n, f = x.shape
    h = w1.shape[1]
    o = w2.shape[1]

    n_p = _round_up(n, LANE)
    f_p = _round_up(f, LANE)
    h_p = _round_up(h, LANE)
    o_p = _round_up(o, LANE)

    tm = _pick_tile(n_p, 512)     # row tile for the N^2 aggregation streams
    tk = _pick_tile(n_p, 1024)    # contraction tile over A_hat columns

    # Zero-pad everything to lane/tile multiples.  Invariant (keep it!):
    #   * padded rows of H1 get b1 added but are (a) masked out of BN stats and
    #     (b) multiplied by the all-zero padded COLUMNS of A_hat in layer 2,
    #     so real output rows are unaffected;
    #   * padded columns stay exactly 0 through both layers.
    a_bf = _pad_to(a_hat, n_p, n_p).astype(jnp.bfloat16)   # bf16 halves the N^2 stream
    x_p = _pad_to(x, n_p, f_p)
    w1_p = _pad_to(w1, f_p, h_p)
    b1_p = _pad_to(b1.reshape(1, -1), 1, h_p)
    g_p = _pad_to(gamma.reshape(1, -1), 1, h_p, value=1.0)
    be_p = _pad_to(beta.reshape(1, -1), 1, h_p)
    w2_p = _pad_to(w2, h_p, o_p)
    b2_p = _pad_to(b2.reshape(1, -1), 1, o_p)

    # Layer 1 feature transform: XW = X @ W1 (bf16 output feeds the resident-B aggregation).
    xw = rowtile_matmul(x_p, w1_p, tm=tm, out_dtype=jnp.bfloat16)

    # Layer 1 aggregation + fused per-tile BN partial stats:
    #   H1 = A_hat @ XW + b1 ;  psum/psq = masked per-row-tile column sums of H1.
    h1, psum, psq = agg_matmul_stats(a_bf, xw, b1_p, n_real=n, tm=tm, tk=tk)

    # Reduce partials and compute BN scale/shift once.
    scale, shift = bn_scale_shift(psum, psq, g_p, be_p, n_real=n)

    # BN + ReLU fused with the layer-2 feature transform: HW2 = relu(BN(H1)) @ W2.
    hw2 = bn_relu_matmul(h1, scale, shift, w2_p, tm=tm, out_dtype=jnp.bfloat16)

    # Layer 2 aggregation: OUT = A_hat @ HW2 + b2.
    out = agg_matmul(a_bf, hw2, b2_p, tm=tm, tk=tk)

    # Slice off padding.
    return out[:n, :o]


# ----------------------------------------------------------------------------
# Plain-JAX glue + reference
# ----------------------------------------------------------------------------
def build_norm_adj(edge_index, num_nodes):
    """Dense D^{-1/2}(A + I)D^{-1/2} from a (2, E) edge_index (plain-JAX glue).

    # TODO(synk): for large sparse graphs replace this dense A_hat with
    # block-sparse tiles driven by PrefetchScalarGridSpec (skip zero blocks).
    """
    src, dst = edge_index[0], edge_index[1]
    a = jnp.zeros((num_nodes, num_nodes), jnp.float32)
    a = a.at[dst, src].set(1.0)                     # message flows src -> dst
    a = a + jnp.eye(num_nodes, dtype=jnp.float32)   # add self-loops
    deg = jnp.sum(a, axis=1)
    dinv = jnp.where(deg > 0, 1.0 / jnp.sqrt(deg), 0.0)
    return a * dinv[:, None] * dinv[None, :]


def reference_forward(a_hat, x, w1, b1, gamma, beta, w2, b2):
    h = a_hat @ (x @ w1) + b1
    mean = jnp.mean(h, axis=0, keepdims=True)
    var = jnp.mean((h - mean) ** 2, axis=0, keepdims=True)
    h = (h - mean) * jax.lax.rsqrt(var + 1e-5) * gamma + beta
    h = jnp.maximum(h, 0.0)
    return a_hat @ (h @ w2) + b2


if __name__ == "__main__":
    # Small shapes consistent with the module; N chosen NOT a multiple of the
    # tile so the row-padding / masked-stats path is exercised.
    num_nodes = 200
    feature_dims = 16
    hidden_dims = 32
    out_dims = 8

    key = jax.random.PRNGKey(0)
    k_x, k_w1, k_b1, k_g, k_be, k_w2, k_b2 = jax.random.split(key, 7)

    x = jax.random.normal(k_x, (num_nodes, feature_dims), dtype=jnp.float32)

    # Ring graph plus +7 chords, both directions: (2, E)
    ids = jnp.arange(num_nodes, dtype=jnp.int32)
    ring_dst = (ids + 1) % num_nodes
    chord_dst = (ids + 7) % num_nodes
    edge_index = jnp.stack(
        [jnp.concatenate([ids, ring_dst, ids, chord_dst]),
         jnp.concatenate([ring_dst, ids, chord_dst, ids])], axis=0)

    w1 = jax.random.normal(k_w1, (feature_dims, hidden_dims), dtype=jnp.float32) * 0.1
    b1 = jax.random.normal(k_b1, (1, hidden_dims), dtype=jnp.float32) * 0.1
    gamma = 1.0 + 0.1 * jax.random.normal(k_g, (1, hidden_dims), dtype=jnp.float32)
    beta = 0.1 * jax.random.normal(k_be, (1, hidden_dims), dtype=jnp.float32)
    w2 = jax.random.normal(k_w2, (hidden_dims, out_dims), dtype=jnp.float32) * 0.1
    b2 = jax.random.normal(k_b2, (1, out_dims), dtype=jnp.float32) * 0.1

    a_hat = build_norm_adj(edge_index, num_nodes)

    out = gcn_forward(a_hat, x, w1, b1, gamma, beta, w2, b2)
    out = jax.block_until_ready(out)

    ref = reference_forward(a_hat, x, w1, b1, gamma, beta, w2, b2)
    assert out.shape == (num_nodes, out_dims)
    # bf16 operands on the aggregation matmuls -> loosen tolerance vs fp32 reference.
    assert jnp.allclose(out, ref, atol=3e-2, rtol=3e-2), "mismatch vs pure-JAX reference"

    print("KERNEL_OK")
</pallas_src>

<mosaic_0001>
module attributes {stable_mosaic.version = 11 : i64} {
  func.func @_rowtile_matmul_kernel(%arg0: i32, %arg1: memref<256x128xf32, #tpu.memory_space<vmem>>, %arg2: memref<128x128xf32, #tpu.memory_space<vmem>>, %arg3: memref<256x128xbf16, #tpu.memory_space<vmem>>) attributes {dimension_semantics = [#tpu.dimension_semantics<parallel>], iteration_bounds = array<i64: 1>, scalar_prefetch = 0 : i64, scratch_operands = 0 : i64, tpu.core_type = #tpu.core_type<tc>, window_params = [{transform_indices = @transform_0, window_bounds = array<i64: 256, 128>}, {pipeline_mode = #tpu.pipeline_mode<synchronous>, transform_indices = @transform_1, window_bounds = array<i64: 128, 128>}, {transform_indices = @transform_2, window_bounds = array<i64: 256, 128>}]} {
    %c0 = arith.constant 0 : index
    %c0_0 = arith.constant 0 : index
    %0 = vector.load %arg1[%c0, %c0_0] : memref<256x128xf32, #tpu.memory_space<vmem>>, vector<256x128xf32>
    %c0_1 = arith.constant 0 : index
    %c0_2 = arith.constant 0 : index
    %1 = vector.load %arg2[%c0_1, %c0_2] : memref<128x128xf32, #tpu.memory_space<vmem>>, vector<128x128xf32>
    %cst = arith.constant dense<0.000000e+00> : vector<256x128xf32>
    %2 = tpu.matmul %0, %1, %cst {dimension_numbers = #tpu.dot_dimension_numbers<[1], [0], [0], [1], [0, 0, 1, 1], [], []>} : vector<256x128xf32>, vector<128x128xf32>, vector<256x128xf32> -> vector<256x128xf32>
    %3 = arith.truncf %2 : vector<256x128xf32> to vector<256x128xbf16>
    %c0_3 = arith.constant 0 : index
    %c0_4 = arith.constant 0 : index
    %4 = vector.load %arg3[%c0_3, %c0_4] : memref<256x128xbf16, #tpu.memory_space<vmem>>, vector<256x128xbf16>
    tpu.vector_store %arg3[%c0_3, %c0_4], %3 {strides = array<i32>} : memref<256x128xbf16, #tpu.memory_space<vmem>>, vector<256x128xbf16>,
    return
  }
  func.func @transform_0(%arg0: i32) -> (i32, i32) {
    %c0_i32 = arith.constant 0 : i32
    %c0_i32_0 = arith.constant 0 : i32
    return %arg0, %c0_i32 : i32, i32
  }
  func.func @transform_1(%arg0: i32) -> (i32, i32) {
    %c0_i32 = arith.constant 0 : i32
    %c0_i32_0 = arith.constant 0 : i32
    %c0_i32_1 = arith.constant 0 : i32
    return %c0_i32, %c0_i32_0 : i32, i32
  }
  func.func @transform_2(%arg0: i32) -> (i32, i32) {
    %c0_i32 = arith.constant 0 : i32
    %c0_i32_0 = arith.constant 0 : i32
    return %arg0, %c0_i32 : i32, i32
  }
}

</mosaic_0001>

<llo_original>
// kernel: tpu_custom_call.1
$region0: #{tpu_custom_call.1}
  #allocation0 [shape = 'u32[]', space=smem, size = 0x4, offset = 0x4, fixed_abs, tag = 'smem constant byte address 0x4 - core index']
  #allocation1 [shape = 'u32[72,128]{1,0:T(1,128)}', space=vmem, size = 0x9000, scoped, tag = 'internal scratch']
  %s0 = inlined_call_operand.hbm [shape: f32[256,128], index: 0, kind: input, shape index: {}]
  %s1 = inlined_call_operand.hbm [shape: f32[128,128], index: 1, kind: input, shape index: {}]
  %s2 = inlined_call_operand.hbm [shape: bf16[256,128], index: 2, kind: output, shape index: {}]
  %s3 = sld [smem:[#allocation0]]
  $region26: #{tpu_custom_call.1} parent=0
    _
  %s5 = ssub.s32 1, %s3
  %s6 = scalar_select 0, %s5, %s3
  $region1: #{tpu_custom_call.1} parent=0
    #allocation2 [shape = 'u8[131072]{0}', space=vmem, size = 0x20000, scoped, tag = 'input window, operand 0, single buffered']
    #allocation3 [shape = 's32[1]{0}', space=sflag, size = 0x4, scoped, tag = 'scoped memory for tpu_custom_call.1']
    #allocation4 [shape = 's32[1]{0}', space=sflag, size = 0x4, scoped, tag = 'scoped memory for tpu_custom_call.1']
    #allocation5 [shape = 'u8[65536]{0}', space=vmem, size = 0x10000, scoped, tag = 'input window, operand 1, single buffered']
    #allocation6 [shape = 's32[1]{0}', space=sflag, size = 0x4, scoped, tag = 'scoped memory for tpu_custom_call.1']
    #allocation7 [shape = 'u8[65536]{0}', space=vmem, size = 0x10000, scoped, tag = 'output window, operand 0, single buffered']
    %7 = vsyncpa [#allocation3], 0
    %8 = vsyncpa [#allocation6], 0
    %9 = vsyncpa [#allocation4], 0
    // Predicated region
    $region2: #{tpu_custom_call.1} parent=1 // pred_check
      _
    $region3: #{tpu_custom_call.1} parent=1 // pred_check_branch
      %11 = sbr.rel (0) target = $region5
    $region4: #{tpu_custom_call.1} parent=1 // pred_region
      %13 = vsyncadd [#allocation3], 0
      %s14 = sshll.u32 %s0, 4
      %s15 = int_to_ptr.hbm [resolvable:$true] %s14
      %s16 = sshll.u32 [#allocation2], 4
      %s17 = int_to_ptr.vmem [resolvable:$true] %s16
      %22 = dma.hbm_to_vmem [thread:$0]  %s15, 4096, %s17, [#allocation3], 128, 128, 8
    $region5: #{tpu_custom_call.1} parent=1 // pred_fallthru
      _
    // Predicated region
    $region6: #{tpu_custom_call.1} parent=1 // pred_check
      _
    $region7: #{tpu_custom_call.1} parent=1 // pred_check_branch
      %24 = sbr.rel (0) target = $region9
    $region8: #{tpu_custom_call.1} parent=1 // pred_region
      %26 = vsyncadd [#allocation6], 0
      %s27 = sshll.u32 %s1, 4
      %s28 = int_to_ptr.hbm [resolvable:$true] %s27
      %s29 = sshll.u32 [#allocation5], 4
      %s30 = int_to_ptr.vmem [resolvable:$true] %s29
      %35 = dma.hbm_to_vmem [thread:$0]  %s28, 2048, %s30, [#allocation6], 128, 128, 8
    $region9: #{tpu_custom_call.1} parent=1 // pred_fallthru
      _
    // Predicated region
    $region10: #{tpu_custom_call.1} parent=1 // pred_check
      _
    $region11: #{tpu_custom_call.1} parent=1 // pred_check_branch
      %37 = sbr.rel (0) target = $region13
    $region12: #{tpu_custom_call.1} parent=1 // pred_region
      %39 = dma.done [#allocation3], 4096
    $region13: #{tpu_custom_call.1} parent=1 // pred_fallthru
      _
    // Predicated region
    $region14: #{tpu_custom_call.1} parent=1 // pred_check
      _
    $region15: #{tpu_custom_call.1} parent=1 // pred_check_branch
      %41 = sbr.rel (0) target = $region17
    $region16: #{tpu_custom_call.1} parent=1 // pred_region
      %43 = dma.done [#allocation6], 2048
    $region17: #{tpu_custom_call.1} parent=1 // pred_fallthru
      _
    %v44 = vld [vmem:[#allocation2] sm:$0xff]
    %v45 = vld [vmem:[#allocation2 + $0x8] sm:$0xff]
    %v46 = vld [vmem:[#allocation2 + $0x10] sm:$0xff]
    %v47 = vld [vmem:[#allocation2 + $0x18] sm:$0xff]
    %v48 = vld [vmem:[#allocation2 + $0x20] sm:$0xff]
    %v49 = vld [vmem:[#allocation2 + $0x28] sm:$0xff]
    %v50 = vld [vmem:[#allocation2 + $0x30] sm:$0xff]
    %v51 = vld [vmem:[#allocation2 + $0x38] sm:$0xff]
    %v52 = vld [vmem:[#allocation2 + $0x40] sm:$0xff]
    %v53 = vld [vmem:[#allocation2 + $0x48] sm:$0xff]
    %v54 = vld [vmem:[#allocation2 + $0x50] sm:$0xff]
    %v55 = vld [vmem:[#allocation2 + $0x58] sm:$0xff]
    %v56 = vld [vmem:[#allocation2 + $0x60] sm:$0xff]
    %v57 = vld [vmem:[#allocation2 + $0x68] sm:$0xff]
    %v58 = vld [vmem:[#allocation2 + $0x70] sm:$0xff]
    %v59 = vld [vmem:[#allocation2 + $0x78] sm:$0xff]
    %v60 = vld [vmem:[#allocation2 + $0x80] sm:$0xff]
    %v61 = vld [vmem:[#allocation2 + $0x88] sm:$0xff]
    %v62 = vld [vmem:[#allocation2 + $0x90] sm:$0xff]
    %v63 = vld [vmem:[#allocation2 + $0x98] sm:$0xff]
    %v64 = vld [vmem:[#allocation2 + $0xa0] sm:$0xff]
    %v65 = vld [vmem:[#allocation2 + $0xa8] sm:$0xff]
    %v66 = vld [vmem:[#allocation2 + $0xb0] sm:$0xff]
    %v67 = vld [vmem:[#allocation2 + $0xb8] sm:$0xff]
    %v68 = vld [vmem:[#allocation2 + $0xc0] sm:$0xff]
    %v69 = vld [vmem:[#allocation2 + $0xc8] sm:$0xff]
    %v70 = vld [vmem:[#allocation2 + $0xd0] sm:$0xff]
    %v71 = vld [vmem:[#allocation2 + $0xd8] sm:$0xff]
    %v72 = vld [vmem:[#allocation2 + $0xe0] sm:$0xff]
    %v73 = vld [vmem:[#allocation2 + $0xe8] sm:$0xff]
    %v74 = vld [vmem:[#allocation2 + $0xf0] sm:$0xff]
    %v75 = vld [vmem:[#allocation2 + $0xf8] sm:$0xff]
    %v76 = vld [vmem:[#allocation5] sm:$0xff]
    %v77 = vld [vmem:[#allocation5 + $0x8] sm:$0xff]
    %v78 = vld [vmem:[#allocation5 + $0x10] sm:$0xff]
    %v79 = vld [vmem:[#allocation5 + $0x18] sm:$0xff]
    %v80 = vld [vmem:[#allocation5 + $0x20] sm:$0xff]
    %v81 = vld [vmem:[#allocation5 + $0x28] sm:$0xff]
    %v82 = vld [vmem:[#allocation5 + $0x30] sm:$0xff]
    %v83 = vld [vmem:[#allocation5 + $0x38] sm:$0xff]
    %v84 = vld [vmem:[#allocation5 + $0x40] sm:$0xff]
    %v85 = vld [vmem:[#allocation5 + $0x48] sm:$0xff]
    %v86 = vld [vmem:[#allocation5 + $0x50] sm:$0xff]
    %v87 = vld [vmem:[#allocation5 + $0x58] sm:$0xff]
    %v88 = vld [vmem:[#allocation5 + $0x60] sm:$0xff]
    %v89 = vld [vmem:[#allocation5 + $0x68] sm:$0xff]
    %v90 = vld [vmem:[#allocation5 + $0x70] sm:$0xff]
    %v91 = vld [vmem:[#allocation5 + $0x78] sm:$0xff]
    %92 = vmatpush.msra.mxu0 %v91
    %93 = vmatpush.msra.mxu0 %v90
    %94 = vmatpush.msra.mxu0 %v89
    %95 = vmatpush.msra.mxu0 %v88
    %96 = vmatpush.msra.mxu0 %v87
    %97 = vmatpush.msra.mxu0 %v86
    %98 = vmatpush.msra.mxu0 %v85
    %99 = vmatpush.msra.mxu0 %v84
    %100 = vmatpush.msra.mxu0 %v83
    %101 = vmatpush.msra.mxu0 %v82
    %102 = vmatpush.msra.mxu0 %v81
    %103 = vmatpush.msra.mxu0 %v80
    %104 = vmatpush.msra.mxu0 %v79
    %105 = vmatpush.msra.mxu0 %v78
    %106 = vmatpush.msra.mxu0 %v77
    %107 = vmatpush.msra.mxu0 %v76
    %108 = vmatmul.f32.gmra.mxu0 %v44
    %v109 = vpop.f32.mrf.mxu0
    %v110 = vadd.f32 0.0, %v109
    %111 = vmatmul.f32.gmra.mxu0 %v45
    %v112 = vpop.f32.mrf.mxu0
    %v113 = vadd.f32 0.0, %v112
    %114 = vmatmul.f32.gmra.mxu0 %v46
    %v115 = vpop.f32.mrf.mxu0
    %v116 = vadd.f32 0.0, %v115
    %117 = vmatmul.f32.gmra.mxu0 %v47
    %v118 = vpop.f32.mrf.mxu0
    %v119 = vadd.f32 0.0, %v118
    %120 = vmatmul.f32.gmra.mxu0 %v48
    %v121 = vpop.f32.mrf.mxu0
    %v122 = vadd.f32 0.0, %v121
    %123 = vmatmul.f32.gmra.mxu0 %v49
    %v124 = vpop.f32.mrf.mxu0
    %v125 = vadd.f32 0.0, %v124
    %126 = vmatmul.f32.gmra.mxu0 %v50
    %v127 = vpop.f32.mrf.mxu0
    %v128 = vadd.f32 0.0, %v127
    %129 = vmatmul.f32.gmra.mxu0 %v51
    %v130 = vpop.f32.mrf.mxu0
    %v131 = vadd.f32 0.0, %v130
    %132 = vmatmul.f32.gmra.mxu0 %v52
    %v133 = vpop.f32.mrf.mxu0
    %v134 = vadd.f32 0.0, %v133
    %135 = vmatmul.f32.gmra.mxu0 %v53
    %v136 = vpop.f32.mrf.mxu0
    %v137 = vadd.f32 0.0, %v136
    %138 = vmatmul.f32.gmra.mxu0 %v54
    %v139 = vpop.f32.mrf.mxu0
    %v140 = vadd.f32 0.0, %v139
    %141 = vmatmul.f32.gmra.mxu0 %v55
    %v142 = vpop.f32.mrf.mxu0
    %v143 = vadd.f32 0.0, %v142
    %144 = vmatmul.f32.gmra.mxu0 %v56
    %v145 = vpop.f32.mrf.mxu0
    %v146 = vadd.f32 0.0, %v145
    %147 = vmatmul.f32.gmra.mxu0 %v57
    %v148 = vpop.f32.mrf.mxu0
    %v149 = vadd.f32 0.0, %v148
    %150 = vmatmul.f32.gmra.mxu0 %v58
    %v151 = vpop.f32.mrf.mxu0
    %v152 = vadd.f32 0.0, %v151
    %153 = vmatmul.f32.gmra.mxu0 %v59
    %v154 = vpop.f32.mrf.mxu0
    %v155 = vadd.f32 0.0, %v154
    %156 = vmatmul.f32.gmra.mxu0 %v60
    %v157 = vpop.f32.mrf.mxu0
    %v158 = vadd.f32 0.0, %v157
    %159 = vmatmul.f32.gmra.mxu0 %v61
    %v160 = vpop.f32.mrf.mxu0
    %v161 = vadd.f32 0.0, %v160
    %162 = vmatmul.f32.gmra.mxu0 %v62
    %v163 = vpop.f32.mrf.mxu0
    %v164 = vadd.f32 0.0, %v163
    %165 = vmatmul.f32.gmra.mxu0 %v63
    %v166 = vpop.f32.mrf.mxu0
    %v167 = vadd.f32 0.0, %v166
    %168 = vmatmul.f32.gmra.mxu0 %v64
    %v169 = vpop.f32.mrf.mxu0
    %v170 = vadd.f32 0.0, %v169
    %171 = vmatmul.f32.gmra.mxu0 %v65
    %v172 = vpop.f32.mrf.mxu0
    %v173 = vadd.f32 0.0, %v172
    %174 = vmatmul.f32.gmra.mxu0 %v66
    %v175 = vpop.f32.mrf.mxu0
    %v176 = vadd.f32 0.0, %v175
    %177 = vmatmul.f32.gmra.mxu0 %v67
    %v178 = vpop.f32.mrf.mxu0
    %v179 = vadd.f32 0.0, %v178
    %180 = vmatmul.f32.gmra.mxu0 %v68
    %v181 = vpop.f32.mrf.mxu0
    %v182 = vadd.f32 0.0, %v181
    %183 = vmatmul.f32.gmra.mxu0 %v69
    %v184 = vpop.f32.mrf.mxu0
    %v185 = vadd.f32 0.0, %v184
    %186 = vmatmul.f32.gmra.mxu0 %v70
    %v187 = vpop.f32.mrf.mxu0
    %v188 = vadd.f32 0.0, %v187
    %189 = vmatmul.f32.gmra.mxu0 %v71
    %v190 = vpop.f32.mrf.mxu0
    %v191 = vadd.f32 0.0, %v190
    %192 = vmatmul.f32.gmra.mxu0 %v72
    %v193 = vpop.f32.mrf.mxu0
    %v194 = vadd.f32 0.0, %v193
    %195 = vmatmul.f32.gmra.mxu0 %v73
    %v196 = vpop.f32.mrf.mxu0
    %v197 = vadd.f32 0.0, %v196
    %198 = vmatmul.f32.gmra.mxu0 %v74
    %v199 = vpop.f32.mrf.mxu0
    %v200 = vadd.f32 0.0, %v199
    %201 = vmatmul.f32.gmra.mxu0 %v75
    %v202 = vpop.f32.mrf.mxu0
    %v203 = vadd.f32 0.0, %v202
    %204 = vdwg.mxu0
    %v205 = vpack.c.bf16 %v110, %v110
    %v206 = vpack.c.bf16 %v113, %v113
    %v207 = vpack.c.bf16 %v116, %v116
    %v208 = vpack.c.bf16 %v119, %v119
    %v209 = vpack.c.bf16 %v122, %v122
    %v210 = vpack.c.bf16 %v125, %v125
    %v211 = vpack.c.bf16 %v128, %v128
    %v212 = vpack.c.bf16 %v131, %v131
    %v213 = vpack.c.bf16 %v134, %v134
    %v214 = vpack.c.bf16 %v137, %v137
    %v215 = vpack.c.bf16 %v140, %v140
    %v216 = vpack.c.bf16 %v143, %v143
    %v217 = vpack.c.bf16 %v146, %v146
    %v218 = vpack.c.bf16 %v149, %v149
    %v219 = vpack.c.bf16 %v152, %v152
    %v220 = vpack.c.bf16 %v155, %v155
    %v221 = vpack.c.bf16 %v158, %v158
    %v222 = vpack.c.bf16 %v161, %v161
    %v223 = vpack.c.bf16 %v164, %v164
    %v224 = vpack.c.bf16 %v167, %v167
    %v225 = vpack.c.bf16 %v170, %v170
    %v226 = vpack.c.bf16 %v173, %v173
    %v227 = vpack.c.bf16 %v176, %v176
    %v228 = vpack.c.bf16 %v179, %v179
    %v229 = vpack.c.bf16 %v182, %v182
    %v230 = vpack.c.bf16 %v185, %v185
    %v231 = vpack.c.bf16 %v188, %v188
    %v232 = vpack.c.bf16 %v191, %v191
    %v233 = vpack.c.bf16 %v194, %v194
    %v234 = vpack.c.bf16 %v197, %v197
    %v235 = vpack.c.bf16 %v200, %v200
    %v236 = vpack.c.bf16 %v203, %v203
    %237 = vst [vmem:[#allocation7] sm:$0xf] %v205
    %238 = vst [vmem:[#allocation7 + $0x4] sm:$0xf] %v206
    %239 = vst [vmem:[#allocation7 + $0x8] sm:$0xf] %v207
    %240 = vst [vmem:[#allocation7 + $0xc] sm:$0xf] %v208
    %241 = vst [vmem:[#allocation7 + $0x10] sm:$0xf] %v209
    %242 = vst [vmem:[#allocation7 + $0x14] sm:$0xf] %v210
    %243 = vst [vmem:[#allocation7 + $0x18] sm:$0xf] %v211
    %244 = vst [vmem:[#allocation7 + $0x1c] sm:$0xf] %v212
    %245 = vst [vmem:[#allocation7 + $0x20] sm:$0xf] %v213
    %246 = vst [vmem:[#allocation7 + $0x24] sm:$0xf] %v214
    %247 = vst [vmem:[#allocation7 + $0x28] sm:$0xf] %v215
    %248 = vst [vmem:[#allocation7 + $0x2c] sm:$0xf] %v216
    %249 = vst [vmem:[#allocation7 + $0x30] sm:$0xf] %v217
    %250 = vst [vmem:[#allocation7 + $0x34] sm:$0xf] %v218
    %251 = vst [vmem:[#allocation7 + $0x38] sm:$0xf] %v219
    %252 = vst [vmem:[#allocation7 + $0x3c] sm:$0xf] %v220
    %253 = vst [vmem:[#allocation7 + $0x40] sm:$0xf] %v221
    %254 = vst [vmem:[#allocation7 + $0x44] sm:$0xf] %v222
    %255 = vst [vmem:[#allocation7 + $0x48] sm:$0xf] %v223
    %256 = vst [vmem:[#allocation7 + $0x4c] sm:$0xf] %v224
    %257 = vst [vmem:[#allocation7 + $0x50] sm:$0xf] %v225
    %258 = vst [vmem:[#allocation7 + $0x54] sm:$0xf] %v226
    %259 = vst [vmem:[#allocation7 + $0x58] sm:$0xf] %v227
    %260 = vst [vmem:[#allocation7 + $0x5c] sm:$0xf] %v228
    %261 = vst [vmem:[#allocation7 + $0x60] sm:$0xf] %v229
    %262 = vst [vmem:[#allocation7 + $0x64] sm:$0xf] %v230
    %263 = vst [vmem:[#allocation7 + $0x68] sm:$0xf] %v231
    %264 = vst [vmem:[#allocation7 + $0x6c] sm:$0xf] %v232
    %265 = vst [vmem:[#allocation7 + $0x70] sm:$0xf] %v233
    %266 = vst [vmem:[#allocation7 + $0x74] sm:$0xf] %v234
    %267 = vst [vmem:[#allocation7 + $0x78] sm:$0xf] %v235
    %268 = vst [vmem:[#allocation7 + $0x7c] sm:$0xf] %v236
    // Predicated region
    $region18: #{tpu_custom_call.1} parent=1 // pred_check
      _
    $region19: #{tpu_custom_call.1} parent=1 // pred_check_branch
      %270 = sbr.rel (0) target = $region21
    $region20: #{tpu_custom_call.1} parent=1 // pred_region
      %272 = vsyncadd [#allocation4], 0
      %s273 = sshll.u32 [#allocation7], 4
      %s274 = int_to_ptr.vmem [resolvable:$true] %s273
      %s275 = sshll.u32 %s2, 4
      %s276 = int_to_ptr.hbm [resolvable:$true] %s275
      %281 = dma.vmem_to_hbm [thread:$0]  %s274, 2048, %s276, [#allocation4], 64, 64, 4
    $region21: #{tpu_custom_call.1} parent=1 // pred_fallthru
      _
    // Predicated region
    $region22: #{tpu_custom_call.1} parent=1 // pred_check
      _
    $region23: #{tpu_custom_call.1} parent=1 // pred_check_branch
      %283 = sbr.rel (0) target = $region25
    $region24: #{tpu_custom_call.1} parent=1 // pred_region
      %285 = dma.done [#allocation4], 2048
    $region25: #{tpu_custom_call.1} parent=1 // pred_fallthru
      _
    %286 = vsyncpa [#allocation3], 1
    %287 = vsyncpa [#allocation6], 1
    %288 = vsyncpa [#allocation4], 1

</llo_original>
